<compile_context>
chip_gen: v7x
topology: tpu7x:2x2x1
jax: 0.10.0
libtpu: 0.0.40
codegen_flags: <defaults>
</compile_context>

<pallas_src>
import jax
import jax.numpy as jnp
import numpy as np
from jax.experimental import pallas as pl
from jax.experimental.pallas import tpu as pltpu


# ------------------------------ Fused kernel --------------------------------

def attention_kernel(qfeat_ref, imfeat_ref, w1im_ref, w1q_ref, b1_ref,
                     w2_ref, b2_ref, out_ref):
    b = pl.program_id(0)

    im = imfeat_ref[0]                        # (N, I)   objects on sublanes
    q_b = qfeat_ref[pl.ds(b, 1), :]           # (1, Q)   this batch's question feature

    # nlin(cat(imfeat, qtile)) == imfeat @ W1_im^T + qfeat @ W1_q^T + b1
    h = jnp.dot(im, w1im_ref[...], preferred_element_type=jnp.float32)        # (N, H)
    h = h + jnp.dot(q_b, w1q_ref[...], preferred_element_type=jnp.float32)    # (1, H) broadcast
    h = h + b1_ref[...]
    h = jnp.maximum(h, 0.0)                   # ReLU
    # TODO(synk): nn.Dropout runs as identity (eval mode).

    # attnmap: 1024 -> 1 as a lane reduction (avoids a lane-padded (1024,1) weight)
    logits = jnp.sum(h * w2_ref[...], axis=1, keepdims=True) + b2_ref[...]    # (N, 1)

    # softmax over the object axis (dim=1 in the PyTorch module)
    m = jnp.max(logits, axis=0, keepdims=True)
    e = jnp.exp(logits - m)
    s = jnp.sum(e, axis=0, keepdims=True)
    out_ref[0] = e / s


def attention_forward(qfeat, imfeat, params):
    B, N, I = imfeat.shape
    Q = qfeat.shape[1]
    H = params["w1im_t"].shape[1]
    return pl.pallas_call(
        attention_kernel,
        out_shape=jax.ShapeDtypeStruct((B, N, 1), jnp.float32),
        grid_spec=pltpu.PrefetchScalarGridSpec(
            num_scalar_prefetch=0,
            grid=(B,),
            in_specs=[
                pl.BlockSpec((B, Q), lambda b: (0, 0)),        # qfeat (whole, resident)
                pl.BlockSpec((1, N, I), lambda b: (b, 0, 0)),  # imfeat, per-batch block
                pl.BlockSpec((I, H), lambda b: (0, 0)),        # W1 image part (resident)
                pl.BlockSpec((Q, H), lambda b: (0, 0)),        # W1 question part (resident)
                pl.BlockSpec((1, H), lambda b: (0, 0)),        # b1
                pl.BlockSpec((1, H), lambda b: (0, 0)),        # attnmap weight row
                pl.BlockSpec((1, 1), lambda b: (0, 0)),        # attnmap bias
            ],
            out_specs=pl.BlockSpec((1, N, 1), lambda b: (b, 0, 0)),
        ),
        compiler_params=pltpu.CompilerParams(
            dimension_semantics=("parallel",),
        ),
    )(qfeat, imfeat, params["w1im_t"], params["w1q_t"], params["b1"],
      params["w2_row"], params["b2"])


# ------------------------------ Reference ------------------------------------

def attention_reference(qfeat, imfeat, w1, b1, w2, b2):
    # Literal translation of the PyTorch forward (dropout = identity).
    B, N, _ = imfeat.shape
    qtile = jnp.repeat(qfeat[:, None, :], N, axis=1)
    qi = jnp.concatenate([imfeat, qtile], axis=2)
    qi = jnp.maximum(qi @ w1.T + b1, 0.0)
    logits = qi @ w2.T + b2                   # (B, N, 1)
    return jax.nn.softmax(logits, axis=1)


# --------------------------------- Main --------------------------------------

if __name__ == "__main__":
    # Small synthetic config (hidden = 1024 and out = 1 are hardcoded in the module)
    B, N = 2, 16                  # batch, num_objs
    IMFEAT, QFEAT, HIDDEN = 64, 32, 1024

    key = jax.random.PRNGKey(0)
    k = jax.random.split(key, 6)

    qfeat = jax.random.normal(k[0], (B, QFEAT), jnp.float32)
    imfeat = jax.random.normal(k[1], (B, N, IMFEAT), jnp.float32)

    # PyTorch parameter layout: nlin.weight (1024, I+Q), attnmap.weight (1, 1024)
    w1 = 0.05 * jax.random.normal(k[2], (HIDDEN, IMFEAT + QFEAT), jnp.float32)
    b1 = 0.05 * jax.random.normal(k[3], (HIDDEN,), jnp.float32)
    w2 = 0.05 * jax.random.normal(k[4], (1, HIDDEN), jnp.float32)
    b2 = 0.05 * jax.random.normal(k[5], (1,), jnp.float32)

    params = {
        # pre-split + pre-transposed so the kernel never materializes cat(imfeat, qtile)
        "w1im_t": jnp.asarray(w1[:, :IMFEAT].T),   # (IMFEAT, HIDDEN)
        "w1q_t": jnp.asarray(w1[:, IMFEAT:].T),    # (QFEAT, HIDDEN)
        "b1": b1.reshape(1, HIDDEN),
        "w2_row": w2,                              # (1, HIDDEN)
        "b2": b2.reshape(1, 1),
    }

    attn = attention_forward(qfeat, imfeat, params)
    attn = jax.block_until_ready(attn)

    ref = attention_reference(qfeat, imfeat, w1, b1, w2, b2)
    np.testing.assert_allclose(np.asarray(attn), np.asarray(ref),
                               rtol=1e-4, atol=1e-4)

    assert attn.shape == (B, N, 1)
    print("KERNEL_OK")
</pallas_src>

<mosaic_0001>
module attributes {stable_mosaic.version = 11 : i64} {
  func.func @attention_kernel(%arg0: i32, %arg1: memref<2x32xf32, #tpu.memory_space<vmem>>, %arg2: memref<1x16x64xf32, #tpu.memory_space<vmem>>, %arg3: memref<64x1024xf32, #tpu.memory_space<vmem>>, %arg4: memref<32x1024xf32, #tpu.memory_space<vmem>>, %arg5: memref<1x1024xf32, #tpu.memory_space<vmem>>, %arg6: memref<1x1024xf32, #tpu.memory_space<vmem>>, %arg7: memref<1x1xf32, #tpu.memory_space<vmem>>, %arg8: memref<1x16x1xf32, #tpu.memory_space<vmem>>) attributes {dimension_semantics = [#tpu.dimension_semantics<parallel>], iteration_bounds = array<i64: 2>, scalar_prefetch = 0 : i64, scratch_operands = 0 : i64, tpu.core_type = #tpu.core_type<tc>, window_params = [{pipeline_mode = #tpu.pipeline_mode<synchronous>, transform_indices = @transform_0, window_bounds = array<i64: 2, 32>}, {transform_indices = @transform_1, window_bounds = array<i64: 1, 16, 64>}, {pipeline_mode = #tpu.pipeline_mode<synchronous>, transform_indices = @transform_2, window_bounds = array<i64: 64, 1024>}, {pipeline_mode = #tpu.pipeline_mode<synchronous>, transform_indices = @transform_3, window_bounds = array<i64: 32, 1024>}, {pipeline_mode = #tpu.pipeline_mode<synchronous>, transform_indices = @transform_4, window_bounds = array<i64: 1, 1024>}, {pipeline_mode = #tpu.pipeline_mode<synchronous>, transform_indices = @transform_5, window_bounds = array<i64: 1, 1024>}, {pipeline_mode = #tpu.pipeline_mode<synchronous>, transform_indices = @transform_6, window_bounds = array<i64: 1, 1>}, {transform_indices = @transform_7, window_bounds = array<i64: 1, 16, 1>}]} {
    %c0 = arith.constant 0 : index
    %c0_0 = arith.constant 0 : index
    %c0_1 = arith.constant 0 : index
    %0 = vector.load %arg2[%c0, %c0_0, %c0_1] : memref<1x16x64xf32, #tpu.memory_space<vmem>>, vector<1x16x64xf32>
    %1 = vector.shape_cast %0 : vector<1x16x64xf32> to vector<16x64xf32>
    %2 = arith.index_cast %arg0 : i32 to index
    %c0_2 = arith.constant 0 : index
    %3 = vector.load %arg1[%2, %c0_2] : memref<2x32xf32, #tpu.memory_space<vmem>>, vector<1x32xf32>
    %c0_3 = arith.constant 0 : index
    %c0_4 = arith.constant 0 : index
    %4 = vector.load %arg3[%c0_3, %c0_4] : memref<64x1024xf32, #tpu.memory_space<vmem>>, vector<64x1024xf32>
    %cst = arith.constant dense<0.000000e+00> : vector<16x1024xf32>
    %5 = tpu.matmul %1, %4, %cst {dimension_numbers = #tpu.dot_dimension_numbers<[1], [0], [0], [1], [0, 0, 1, 1], [], []>} : vector<16x64xf32>, vector<64x1024xf32>, vector<16x1024xf32> -> vector<16x1024xf32>
    %c0_5 = arith.constant 0 : index
    %c0_6 = arith.constant 0 : index
    %6 = vector.load %arg4[%c0_5, %c0_6] : memref<32x1024xf32, #tpu.memory_space<vmem>>, vector<32x1024xf32>
    %cst_7 = arith.constant dense<0.000000e+00> : vector<1x1024xf32>
    %7 = tpu.matmul %3, %6, %cst_7 {dimension_numbers = #tpu.dot_dimension_numbers<[1], [0], [0], [1], [0, 0, 1, 1], [], []>} : vector<1x32xf32>, vector<32x1024xf32>, vector<1x1024xf32> -> vector<1x1024xf32>
    %8 = vector.broadcast %7 : vector<1x1024xf32> to vector<16x1024xf32>
    %9 = arith.addf %5, %8 : vector<16x1024xf32>
    %c0_8 = arith.constant 0 : index
    %c0_9 = arith.constant 0 : index
    %10 = vector.load %arg5[%c0_8, %c0_9] : memref<1x1024xf32, #tpu.memory_space<vmem>>, vector<1x1024xf32>
    %11 = vector.broadcast %10 : vector<1x1024xf32> to vector<16x1024xf32>
    %12 = arith.addf %9, %11 : vector<16x1024xf32>
    %cst_10 = arith.constant 0.000000e+00 : f32
    %13 = vector.broadcast %cst_10 : f32 to vector<16x1024xf32>
    %14 = arith.maximumf %12, %13 : vector<16x1024xf32>
    %c0_11 = arith.constant 0 : index
    %c0_12 = arith.constant 0 : index
    %15 = vector.load %arg6[%c0_11, %c0_12] : memref<1x1024xf32, #tpu.memory_space<vmem>>, vector<1x1024xf32>
    %16 = vector.broadcast %15 : vector<1x1024xf32> to vector<16x1024xf32>
    %17 = arith.mulf %14, %16 : vector<16x1024xf32>
    %cst_13 = arith.constant dense<0.000000e+00> : vector<16xf32>
    %18 = vector.multi_reduction <add>, %17, %cst_13 [1] : vector<16x1024xf32> to vector<16xf32>
    %19 = vector.shape_cast %18 : vector<16xf32> to vector<16x1xf32>
    %c0_14 = arith.constant 0 : index
    %c0_15 = arith.constant 0 : index
    %20 = vector.load %arg7[%c0_14, %c0_15] : memref<1x1xf32, #tpu.memory_space<vmem>>, vector<1x1xf32>
    %21 = vector.broadcast %20 : vector<1x1xf32> to vector<16x1xf32>
    %22 = arith.addf %19, %21 : vector<16x1xf32>
    %cst_16 = arith.constant dense<0xFF800000> : vector<1xf32>
    %23 = vector.multi_reduction <maximumf>, %22, %cst_16 [0] : vector<16x1xf32> to vector<1xf32>
    %24 = vector.shape_cast %23 : vector<1xf32> to vector<1x1xf32>
    %25 = vector.broadcast %24 : vector<1x1xf32> to vector<16x1xf32>
    %26 = arith.subf %22, %25 : vector<16x1xf32>
    %27 = math.exp %26 : vector<16x1xf32>
    %cst_17 = arith.constant dense<0.000000e+00> : vector<1xf32>
    %28 = vector.multi_reduction <add>, %27, %cst_17 [0] : vector<16x1xf32> to vector<1xf32>
    %29 = vector.shape_cast %28 : vector<1xf32> to vector<1x1xf32>
    %30 = vector.broadcast %29 : vector<1x1xf32> to vector<16x1xf32>
    %31 = arith.divf %27, %30 : vector<16x1xf32>
    %c0_18 = arith.constant 0 : index
    %c0_19 = arith.constant 0 : index
    %c0_20 = arith.constant 0 : index
    %32 = vector.load %arg8[%c0_18, %c0_19, %c0_20] : memref<1x16x1xf32, #tpu.memory_space<vmem>>, vector<1x16x1xf32>
    %33 = vector.shape_cast %32 : vector<1x16x1xf32> to vector<16x1xf32>
    %34 = vector.shape_cast %31 : vector<16x1xf32> to vector<1x16x1xf32>
    tpu.vector_store %arg8[%c0_18, %c0_19, %c0_20], %34 {strides = array<i32>} : memref<1x16x1xf32, #tpu.memory_space<vmem>>, vector<1x16x1xf32>,
    return
  }
  func.func @transform_0(%arg0: i32) -> (i32, i32) {
    %c0_i32 = arith.constant 0 : i32
    %c0_i32_0 = arith.constant 0 : i32
    %c0_i32_1 = arith.constant 0 : i32
    return %c0_i32, %c0_i32_0 : i32, i32
  }
  func.func @transform_1(%arg0: i32) -> (i32, i32, i32) {
    %c0_i32 = arith.constant 0 : i32
    %c0_i32_0 = arith.constant 0 : i32
    %c0_i32_1 = arith.constant 0 : i32
    return %arg0, %c0_i32, %c0_i32_0 : i32, i32, i32
  }
  func.func @transform_2(%arg0: i32) -> (i32, i32) {
    %c0_i32 = arith.constant 0 : i32
    %c0_i32_0 = arith.constant 0 : i32
    %c0_i32_1 = arith.constant 0 : i32
    return %c0_i32, %c0_i32_0 : i32, i32
  }
  func.func @transform_3(%arg0: i32) -> (i32, i32) {
    %c0_i32 = arith.constant 0 : i32
    %c0_i32_0 = arith.constant 0 : i32
    %c0_i32_1 = arith.constant 0 : i32
    return %c0_i32, %c0_i32_0 : i32, i32
  }
  func.func @transform_4(%arg0: i32) -> (i32, i32) {
    %c0_i32 = arith.constant 0 : i32
    %c0_i32_0 = arith.constant 0 : i32
    %c0_i32_1 = arith.constant 0 : i32
    return %c0_i32, %c0_i32_0 : i32, i32
  }
  func.func @transform_5(%arg0: i32) -> (i32, i32) {
    %c0_i32 = arith.constant 0 : i32
    %c0_i32_0 = arith.constant 0 : i32
    %c0_i32_1 = arith.constant 0 : i32
    return %c0_i32, %c0_i32_0 : i32, i32
  }
  func.func @transform_6(%arg0: i32) -> (i32, i32) {
    %c0_i32 = arith.constant 0 : i32
    %c0_i32_0 = arith.constant 0 : i32
    %c0_i32_1 = arith.constant 0 : i32
    return %c0_i32, %c0_i32_0 : i32, i32
  }
  func.func @transform_7(%arg0: i32) -> (i32, i32, i32) {
    %c0_i32 = arith.constant 0 : i32
    %c0_i32_0 = arith.constant 0 : i32
    %c0_i32_1 = arith.constant 0 : i32
    return %arg0, %c0_i32, %c0_i32_0 : i32, i32, i32
  }
}

</mosaic_0001>

<llo_original>
// kernel: tpu_custom_call.1
$region0: #{tpu_custom_call.1}
  #allocation0 [shape = 'u32[]', space=smem, size = 0x4, offset = 0x4, fixed_abs, tag = 'smem constant byte address 0x4 - core index']
  #allocation1 [shape = 'u32[144,128]{1,0:T(1,128)}', space=vmem, size = 0x12000, scoped, tag = 'internal scratch']
  #allocation2 [shape = 'f32[1,1]{1,0:T(1,128)S(1)}', space=vmem, size = 0x200, scoped, tag = 'scoped memory for tpu_custom_call.1']
  %s0 = inlined_call_operand.vmem [shape: f32[2,32], index: 0, kind: input, shape index: {}]
  %s1 = inlined_call_operand.hbm [shape: f32[2,16,64], index: 1, kind: input, shape index: {}]
  %s2 = inlined_call_operand.hbm [shape: f32[64,1024], index: 2, kind: input, shape index: {}]
  %s3 = inlined_call_operand.hbm [shape: f32[32,1024], index: 3, kind: input, shape index: {}]
  %s4 = inlined_call_operand.vmem [shape: f32[1,1024], index: 4, kind: input, shape index: {}]
  %s5 = inlined_call_operand.vmem [shape: f32[1,1024], index: 5, kind: input, shape index: {}]
  %s6 = inlined_call_operand.<no memory space> [shape: f32[1,1], index: 6, kind: input, shape index: {}]
  %s7 = inlined_call_operand.vmem [shape: f32[2,16,1], index: 7, kind: output, shape index: {}]
  %s8 = sld [smem:[#allocation0]]
  $region73: #{tpu_custom_call.1} parent=0
    _
  %s10 = ssub.s32 1, %s8
  %s11 = scalar_select 0, %s10, %s8
  %v12 = vstv %s6
  %13 = vst [vmem:[#allocation2] sm:$0x1] %v12
  $region1: #{tpu_custom_call.1} parent=0
    #allocation3 [shape = 'u8[16384]{0}', space=vmem, size = 0x4000, scoped, tag = 'input window, operand 1']
    #allocation4 [shape = 's32[2]{0}', space=sflag, size = 0x8, scoped, tag = 'scoped memory for tpu_custom_call.1']
    #allocation5 [shape = 'u8[262144]{0}', space=vmem, size = 0x40000, scoped, tag = 'input window, operand 2, single buffered']
    #allocation6 [shape = 's32[1]{0}', space=sflag, size = 0x4, scoped, tag = 'scoped memory for tpu_custom_call.1']
    #allocation7 [shape = 'u8[131072]{0}', space=vmem, size = 0x20000, scoped, tag = 'input window, operand 3, single buffered']
    %14 = vsyncpa [#allocation4], 0
    %s15 = scalar_lea.sflag [#allocation4], 1
    %16 = vsyncpa %s15, 0
    %17 = vsyncpa [#allocation6], 0
    loop: start=0, step=1, limit=4
    $region2: #{tpu_custom_call.1} parent=1 // loop_pre_header
      _
    $region3: #{tpu_custom_call.1} parent=1 // loop_header
      %s19 = sphi 0, %s23
      %p20 = scmp.ge.s32.totalorder %s19, 4
      %s27 = sphi 0, %s27
      %s29 = sphi 0, %s27
      %s30 = sphi 0, %s29
      %s44 = sphi 0, %s30
      %s50 = sphi 0, %s52
      %s53 = sphi 0, %s50
      %s54 = sphi 0, %s53
      %s70 = sphi 0, %s54
      %s74 = sphi 0, %s74
      %s76 = sphi 0, %s74
      %s77 = sphi 0, %s76
      %s91 = sphi 0, %s77
      %s95 = sphi 0, %s95
      %s97 = sphi 0, %s95
      %s98 = sphi 0, %s97
      %s112 = sphi 0, %s98
      %s116 = sphi 0, %s116
      %s118 = sphi 0, %s116
      %s119 = sphi 0, %s118
      %s133 = sphi 0, %s119
      %s137 = sphi 0, %s137
      %s139 = sphi 0, %s137
      %s140 = sphi 0, %s139
      %s154 = sphi 0, %s140
      %s158 = sphi 0, %s158
      %s160 = sphi 0, %s158
      %s161 = sphi 0, %s160
      %s175 = sphi 0, %s161
      %s181 = sphi 0, %s183
      %s184 = sphi 0, %s181
      %s185 = sphi 0, %s184
      %s201 = sphi 0, %s185
    $region4: #{tpu_custom_call.1} parent=1 // loop_header_branch
      %22 = sbr.rel (%p20) target = $region8
    $region5: #{tpu_custom_call.1} parent=1 // loop_body
      %s24 = ssub.s32 %s19, 1
      %s25 = ssub.s32 %s19, 2
      %s26 = sadd.s32 %s19, 1
      %s28 = sadd.s32 %s27, 1
      %p31 = scmp.eq.s32.totalorder %s19, 1
      %p32 = scmp.ne.s32.totalorder %s27, %s29
      %p33 = scmp.eq.s32.totalorder %s19, 0
      %p34 = por %p32, %p33
      %p35 = scmp.ne.s32.totalorder %s27, %s29
      %p36 = scmp.eq.s32.totalorder %s24, 1
      %p37 = por %p35, %p36
      %p38 = scmp.ne.s32.totalorder %s29, %s30
      %p39 = scmp.eq.s32.totalorder %s24, 0
      %p40 = por %p38, %p39
      %p41 = scmp.ne.s32.totalorder %s29, %s30
      %p42 = scmp.eq.s32.totalorder %s25, 1
      %p43 = por %p41, %p42
      %p45 = scmp.ne.s32.totalorder %s30, %s44
      %p46 = scmp.eq.s32.totalorder %s25, 0
      %p47 = por %p45, %p46
      %s48 = ssub.s32 %s19, %s26
      %p49 = scmp.eq.s32.totalorder %s48, 0
      %s51 = sadd.s32 %s50, 1
      %s52 = scalar_select %p49, %s50, %s51
      %p55 = pneg %p49
      %p56 = scmp.eq.s32.totalorder %s19, 1
      %p57 = por %p55, %p56
      %p58 = scmp.ne.s32.totalorder %s50, %s53
      %p59 = scmp.eq.s32.totalorder %s19, 0
      %p60 = por %p58, %p59
      %p61 = scmp.ne.s32.totalorder %s50, %s53
      %p62 = scmp.eq.s32.totalorder %s24, 1
      %p63 = por %p61, %p62
      %p64 = scmp.ne.s32.totalorder %s53, %s54
      %p65 = scmp.eq.s32.totalorder %s24, 0
      %p66 = por %p64, %p65
      %p67 = scmp.ne.s32.totalorder %s53, %s54
      %p68 = scmp.eq.s32.totalorder %s25, 1
      %p69 = por %p67, %p68
      %p71 = scmp.ne.s32.totalorder %s54, %s70
      %p72 = scmp.eq.s32.totalorder %s25, 0
      %p73 = por %p71, %p72
      %s75 = sadd.s32 %s74, 1
      %p78 = scmp.eq.s32.totalorder %s19, 1
      %p79 = scmp.ne.s32.totalorder %s74, %s76
      %p80 = scmp.eq.s32.totalorder %s19, 0
      %p81 = por %p79, %p80
      %p82 = scmp.ne.s32.totalorder %s74, %s76
      %p83 = scmp.eq.s32.totalorder %s24, 1
      %p84 = por %p82, %p83
      %p85 = scmp.ne.s32.totalorder %s76, %s77
      %p86 = scmp.eq.s32.totalorder %s24, 0
      %p87 = por %p85, %p86
      %p88 = scmp.ne.s32.totalorder %s76, %s77
      %p89 = scmp.eq.s32.totalorder %s25, 1
      %p90 = por %p88, %p89
      %p92 = scmp.ne.s32.totalorder %s77, %s91
      %p93 = scmp.eq.s32.totalorder %s25, 0
      %p94 = por %p92, %p93
      %s96 = sadd.s32 %s95, 1
      %p99 = scmp.eq.s32.totalorder %s19, 1
      %p100 = scmp.ne.s32.totalorder %s95, %s97
      %p101 = scmp.eq.s32.totalorder %s19, 0
      %p102 = por %p100, %p101
      %p103 = scmp.ne.s32.totalorder %s95, %s97
      %p104 = scmp.eq.s32.totalorder %s24, 1
      %p105 = por %p103, %p104
      %p106 = scmp.ne.s32.totalorder %s97, %s98
      %p107 = scmp.eq.s32.totalorder %s24, 0
      %p108 = por %p106, %p107
      %p109 = scmp.ne.s32.totalorder %s97, %s98
      %p110 = scmp.eq.s32.totalorder %s25, 1
      %p111 = por %p109, %p110
      %p113 = scmp.ne.s32.totalorder %s98, %s112
      %p114 = scmp.eq.s32.totalorder %s25, 0
      %p115 = por %p113, %p114
      %s117 = sadd.s32 %s116, 1
      %p120 = scmp.eq.s32.totalorder %s19, 1
      %p121 = scmp.ne.s32.totalorder %s116, %s118
      %p122 = scmp.eq.s32.totalorder %s19, 0
      %p123 = por %p121, %p122
      %p124 = scmp.ne.s32.totalorder %s116, %s118
      %p125 = scmp.eq.s32.totalorder %s24, 1
      %p126 = por %p124, %p125
      %p127 = scmp.ne.s32.totalorder %s118, %s119
      %p128 = scmp.eq.s32.totalorder %s24, 0
      %p129 = por %p127, %p128
      %p130 = scmp.ne.s32.totalorder %s118, %s119
      %p131 = scmp.eq.s32.totalorder %s25, 1
      %p132 = por %p130, %p131
      %p134 = scmp.ne.s32.totalorder %s119, %s133
      %p135 = scmp.eq.s32.totalorder %s25, 0
      %p136 = por %p134, %p135
      %s138 = sadd.s32 %s137, 1
      %p141 = scmp.eq.s32.totalorder %s19, 1
      %p142 = scmp.ne.s32.totalorder %s137, %s139
      %p143 = scmp.eq.s32.totalorder %s19, 0
      %p144 = por %p142, %p143
      %p145 = scmp.ne.s32.totalorder %s137, %s139
      %p146 = scmp.eq.s32.totalorder %s24, 1
      %p147 = por %p145, %p146
      %p148 = scmp.ne.s32.totalorder %s139, %s140
      %p149 = scmp.eq.s32.totalorder %s24, 0
      %p150 = por %p148, %p149
      %p151 = scmp.ne.s32.totalorder %s139, %s140
      %p152 = scmp.eq.s32.totalorder %s25, 1
      %p153 = por %p151, %p152
      %p155 = scmp.ne.s32.totalorder %s140, %s154
      %p156 = scmp.eq.s32.totalorder %s25, 0
      %p157 = por %p155, %p156
      %s159 = sadd.s32 %s158, 1
      %p162 = scmp.eq.s32.totalorder %s19, 1
      %p163 = scmp.ne.s32.totalorder %s158, %s160
      %p164 = scmp.eq.s32.totalorder %s19, 0
      %p165 = por %p163, %p164
      %p166 = scmp.ne.s32.totalorder %s158, %s160
      %p167 = scmp.eq.s32.totalorder %s24, 1
      %p168 = por %p166, %p167
      %p169 = scmp.ne.s32.totalorder %s160, %s161
      %p170 = scmp.eq.s32.totalorder %s24, 0
      %p171 = por %p169, %p170
      %p172 = scmp.ne.s32.totalorder %s160, %s161
      %p173 = scmp.eq.s32.totalorder %s25, 1
      %p174 = por %p172, %p173
      %p176 = scmp.ne.s32.totalorder %s161, %s175
      %p177 = scmp.eq.s32.totalorder %s25, 0
      %p178 = por %p176, %p177
      %s179 = ssub.s32 %s19, %s26
      %p180 = scmp.eq.s32.totalorder %s179, 0
      %s182 = sadd.s32 %s181, 1
      %s183 = scalar_select %p180, %s181, %s182
      %p186 = pneg %p180
      %p187 = scmp.eq.s32.totalorder %s19, 1
      %p188 = por %p186, %p187
      %p189 = scmp.ne.s32.totalorder %s181, %s184
      %p190 = scmp.eq.s32.totalorder %s19, 0
      %p191 = por %p189, %p190
      %p192 = scmp.ne.s32.totalorder %s181, %s184
      %p193 = scmp.eq.s32.totalorder %s24, 1
      %p194 = por %p192, %p193
      %p195 = scmp.ne.s32.totalorder %s184, %s185
      %p196 = scmp.eq.s32.totalorder %s24, 0
      %p197 = por %p195, %p196
      %p198 = scmp.ne.s32.totalorder %s184, %s185
      %p199 = scmp.eq.s32.totalorder %s25, 1
      %p200 = por %p198, %p199
      %p202 = scmp.ne.s32.totalorder %s185, %s201
      %p203 = scmp.eq.s32.totalorder %s25, 0
      %p204 = por %p202, %p203
      %p205 = scmp.le.s32.totalorder 1, %s19
      %p206 = scmp.lt.s32.totalorder %s19, 3
      %p207 = pnand %p205, %p206
      %p208 = pneg %p207
      // Predicated region
      $region9: #{tpu_custom_call.1} parent=5 // pred_check
        _
      $region10: #{tpu_custom_call.1} parent=5 // pred_check_branch
        %210 = sbr.rel (%p207) target = $region12
      $region11: #{tpu_custom_call.1} parent=5 // pred_region
        %s211 = ssub.s32 %s19, 1
        // Predicated region
        $region13: #{tpu_custom_call.1} parent=11 // pred_check
          %p212 = pneg %p40
        $region14: #{tpu_custom_call.1} parent=11 // pred_check_branch
          %214 = sbr.rel (%p212) target = $region16
        $region15: #{tpu_custom_call.1} parent=11 // pred_region
          _
        $region16: #{tpu_custom_call.1} parent=11 // pred_fallthru
          _
        // Predicated region
        $region17: #{tpu_custom_call.1} parent=11 // pred_check
          %p215 = pneg %p87
        $region18: #{tpu_custom_call.1} parent=11 // pred_check_branch
          %217 = sbr.rel (%p215) target = $region20
        $region19: #{tpu_custom_call.1} parent=11 // pred_region
          %s219 = ssub.s32 8192, 8192
          %220 = vsyncadd [#allocation6], %s219
          %s221 = sshll.u32 [#allocation5], 4
          %s222 = int_to_ptr.vmem [resolvable:$true] %s221
          %227 = dma.hbm_to_vmem [thread:$0]  %s2, 8192, %s222, [#allocation6], 1024, 1024, 64
        $region20: #{tpu_custom_call.1} parent=11 // pred_fallthru
          _
        // Predicated region
        $region21: #{tpu_custom_call.1} parent=11 // pred_check
          %p228 = pneg %p108
        $region22: #{tpu_custom_call.1} parent=11 // pred_check_branch
          %230 = sbr.rel (%p228) target = $region24
        $region23: #{tpu_custom_call.1} parent=11 // pred_region
          %s232 = ssub.s32 4096, 4096
          %233 = vsyncadd [#allocation6], %s232
          %s234 = sshll.u32 [#allocation7], 4
          %s235 = int_to_ptr.vmem [resolvable:$true] %s234
          %240 = dma.hbm_to_vmem [thread:$0]  %s3, 4096, %s235, [#allocation6], 1024, 1024, 64
        $region24: #{tpu_custom_call.1} parent=11 // pred_fallthru
          _
        // Predicated region
        $region25: #{tpu_custom_call.1} parent=11 // pred_check
          %p241 = pneg %p129
        $region26: #{tpu_custom_call.1} parent=11 // pred_check_branch
          %243 = sbr.rel (%p241) target = $region28
        $region27: #{tpu_custom_call.1} parent=11 // pred_region
          _
        $region28: #{tpu_custom_call.1} parent=11 // pred_fallthru
          _
        // Predicated region
        $region29: #{tpu_custom_call.1} parent=11 // pred_check
          %p244 = pneg %p150
        $region30: #{tpu_custom_call.1} parent=11 // pred_check_branch
          %246 = sbr.rel (%p244) target = $region32
        $region31: #{tpu_custom_call.1} parent=11 // pred_region
          _
        $region32: #{tpu_custom_call.1} parent=11 // pred_fallthru
          _
        // Predicated region
        $region33: #{tpu_custom_call.1} parent=11 // pred_check
          %p247 = pneg %p171
        $region34: #{tpu_custom_call.1} parent=11 // pred_check_branch
          %249 = sbr.rel (%p247) target = $region36
        $region35: #{tpu_custom_call.1} parent=11 // pred_region
          _
        $region36: #{tpu_custom_call.1} parent=11 // pred_fallthru
          _
      $region12: #{tpu_custom_call.1} parent=5 // pred_fallthru
        _
      %p250 = scmp.lt.s32.totalorder %s19, 2
      // Predicated region
      $region37: #{tpu_custom_call.1} parent=5 // pred_check
        %p251 = pneg %p250
      $region38: #{tpu_custom_call.1} parent=5 // pred_check_branch
        %253 = sbr.rel (%p251) target = $region40
      $region39: #{tpu_custom_call.1} parent=5 // pred_region
        // Predicated region
        $region41: #{tpu_custom_call.1} parent=39 // pred_check
          %p254 = pneg %p60
        $region42: #{tpu_custom_call.1} parent=39 // pred_check_branch
          %256 = sbr.rel (%p254) target = $region44
        $region43: #{tpu_custom_call.1} parent=39 // pred_region
          %s257 = sand.u32 %s50, 1
          %s258 = scalar_lea.sflag [#allocation4], %s257
          %s259 = sand.u32 %s50, 1
          %s260 = smul.addr %s259, 16
          %s261 = scalar_lea.vmem [#allocation3], %s260
          %s263 = ssub.s32 256, 256
          %264 = vsyncadd %s258, %s263
          %s265 = smul.addr %s19, 2
          %s266 = smul.addr %s265, 128
          %s267 = scalar_lea.hbm %s1, %s266
          %s268 = sshll.u32 %s261, 4
          %s269 = int_to_ptr.vmem [resolvable:$true] %s268
          %274 = dma.hbm_to_vmem [thread:$0]  %s267, 256, %s269, %s258, 128, 128, 8
        $region44: #{tpu_custom_call.1} parent=39 // pred_fallthru
          _
      $region40: #{tpu_custom_call.1} parent=5 // pred_fallthru
        _
      %p275 = scmp.le.s32.totalorder 1, %s19
      %p276 = scmp.lt.s32.totalorder %s19, 3
      %p277 = pnand %p275, %p276
      %p278 = pneg %p277
      // Predicated region
      $region45: #{tpu_custom_call.1} parent=5 // pred_check
        _
      $region46: #{tpu_custom_call.1} parent=5 // pred_check_branch
        %280 = sbr.rel (%p277) target = $region48
      $region47: #{tpu_custom_call.1} parent=5 // pred_region
        %s281 = ssub.s32 %s19, 1
        %s282 = sand.u32 %s53, 1
        %s283 = scalar_lea.sflag [#allocation4], %s282
        %s284 = sand.u32 %s53, 1
        %s285 = smul.addr %s284, 16
        %s286 = scalar_lea.vmem [#allocation3], %s285
        // Predicated region
        $region49: #{tpu_custom_call.1} parent=47 // pred_check
          %p287 = pneg %p66
        $region50: #{tpu_custom_call.1} parent=47 // pred_check_branch
          %289 = sbr.rel (%p287) target = $region52
        $region51: #{tpu_custom_call.1} parent=47 // pred_region
          %290 = dma.done %s283, 256
        $region52: #{tpu_custom_call.1} parent=47 // pred_fallthru
          _
        // Predicated region
        $region53: #{tpu_custom_call.1} parent=47 // pred_check
          %p291 = pneg %p87
        $region54: #{tpu_custom_call.1} parent=47 // pred_check_branch
          %293 = sbr.rel (%p291) target = $region56
        $region55: #{tpu_custom_call.1} parent=47 // pred_region
          %294 = dma.done [#allocation6], 8192
        $region56: #{tpu_custom_call.1} parent=47 // pred_fallthru
          _
        // Predicated region
        $region57: #{tpu_custom_call.1} parent=47 // pred_check
          %p295 = pneg %p108
        $region58: #{tpu_custom_call.1} parent=47 // pred_check_branch
          %297 = sbr.rel (%p295) target = $region60
        $region59: #{tpu_custom_call.1} parent=47 // pred_region
          %298 = dma.done [#allocation6], 4096
        $region60: #{tpu_custom_call.1} parent=47 // pred_fallthru
          _
        %p299 = pneg %p40
        %p300 = pneg %p37
        %s301 = sand.u32 %s53, 1
        %s302 = scalar_lea.sflag [#allocation4], %s301
        %s303 = sand.u32 %s53, 1
        %s304 = smul.addr %s303, 16
        %s305 = scalar_lea.vmem [#allocation3], %s304
        %p306 = pneg %p66
        %p307 = pneg %p63
        %p308 = pneg %p87
        %p309 = pneg %p84
        %p310 = pneg %p108
        %p311 = pneg %p105
        %p312 = pneg %p129
        %p313 = pneg %p126
        %p314 = pneg %p150
        %p315 = pneg %p147
        %p316 = pneg %p171
        %p317 = pneg %p168
        %p318 = pneg %p197
        %p319 = pneg %p194
        %p320 = scmp.lt.s32.totalorder %s24, 1
        %s321 = scalar_select %p320, %s24, 1
        %s322 = smul.addr %s321, 2
        %s323 = smul.addr %s322, 8
        %s324 = scalar_lea.vmem %s7, %s323
        %p325 = scmp.lt.s32.totalorder %s24, 1
        %s326 = scalar_select %p325, %s24, 1
        %s327 = smul.addr %s326, 2
        %s328 = smul.addr %s327, 8
        %s329 = scalar_lea.vmem %s7, %s328
        %v330 = vld [vmem:[%s286] sm:$0xff]
        %v331 = vld [vmem:[%s286 + $0x8] sm:$0xff]
        %s332 = scalar_lea.vmem %s0, %s24
        %v333 = vld [vmem:[%s332] sm:$0x1]
        %v334 = vld [vmem:[#allocation5] sm:$0xff]
        %v335 = vld [vmem:[#allocation5 + $0x8] sm:$0xff]
        %v336 = vld [vmem:[#allocation5 + $0x10] sm:$0xff]
        %v337 = vld [vmem:[#allocation5 + $0x18] sm:$0xff]
        %v338 = vld [vmem:[#allocation5 + $0x20] sm:$0xff]
        %v339 = vld [vmem:[#allocation5 + $0x28] sm:$0xff]
        %v340 = vld [vmem:[#allocation5 + $0x30] sm:$0xff]
        %v341 = vld [vmem:[#allocation5 + $0x38] sm:$0xff]
        %v342 = vld [vmem:[#allocation5 + $0x40] sm:$0xff]
        %v343 = vld [vmem:[#allocation5 + $0x48] sm:$0xff]
        %v344 = vld [vmem:[#allocation5 + $0x50] sm:$0xff]
        %v345 = vld [vmem:[#allocation5 + $0x58] sm:$0xff]
        %v346 = vld [vmem:[#allocation5 + $0x60] sm:$0xff]
        %v347 = vld [vmem:[#allocation5 + $0x68] sm:$0xff]
        %v348 = vld [vmem:[#allocation5 + $0x70] sm:$0xff]
        %v349 = vld [vmem:[#allocation5 + $0x78] sm:$0xff]
        %v350 = vld [vmem:[#allocation5 + $0x80] sm:$0xff]
        %v351 = vld [vmem:[#allocation5 + $0x88] sm:$0xff]
        %v352 = vld [vmem:[#allocation5 + $0x90] sm:$0xff]
        %v353 = vld [vmem:[#allocation5 + $0x98] sm:$0xff]
        %v354 = vld [vmem:[#allocation5 + $0xa0] sm:$0xff]
        %v355 = vld [vmem:[#allocation5 + $0xa8] sm:$0xff]
        %v356 = vld [vmem:[#allocation5 + $0xb0] sm:$0xff]
        %v357 = vld [vmem:[#allocation5 + $0xb8] sm:$0xff]
        %v358 = vld [vmem:[#allocation5 + $0xc0] sm:$0xff]
        %v359 = vld [vmem:[#allocation5 + $0xc8] sm:$0xff]
        %v360 = vld [vmem:[#allocation5 + $0xd0] sm:$0xff]
        %v361 = vld [vmem:[#allocation5 + $0xd8] sm:$0xff]
        %v362 = vld [vmem:[#allocation5 + $0xe0] sm:$0xff]
        %v363 = vld [vmem:[#allocation5 + $0xe8] sm:$0xff]
        %v364 = vld [vmem:[#allocation5 + $0xf0] sm:$0xff]
        %v365 = vld [vmem:[#allocation5 + $0xf8] sm:$0xff]
        %v366 = vld [vmem:[#allocation5 + $0x100] sm:$0xff]
        %v367 = vld [vmem:[#allocation5 + $0x108] sm:$0xff]
        %v368 = vld [vmem:[#allocation5 + $0x110] sm:$0xff]
        %v369 = vld [vmem:[#allocation5 + $0x118] sm:$0xff]
        %v370 = vld [vmem:[#allocation5 + $0x120] sm:$0xff]
        %v371 = vld [vmem:[#allocation5 + $0x128] sm:$0xff]
        %v372 = vld [vmem:[#allocation5 + $0x130] sm:$0xff]
        %v373 = vld [vmem:[#allocation5 + $0x138] sm:$0xff]
        %v374 = vld [vmem:[#allocation5 + $0x140] sm:$0xff]
        %v375 = vld [vmem:[#allocation5 + $0x148] sm:$0xff]
        %v376 = vld [vmem:[#allocation5 + $0x150] sm:$0xff]
        %v377 = vld [vmem:[#allocation5 + $0x158] sm:$0xff]
        %v378 = vld [vmem:[#allocation5 + $0x160] sm:$0xff]
        %v379 = vld [vmem:[#allocation5 + $0x168] sm:$0xff]
        %v380 = vld [vmem:[#allocation5 + $0x170] sm:$0xff]
        %v381 = vld [vmem:[#allocation5 + $0x178] sm:$0xff]
        %v382 = vld [vmem:[#allocation5 + $0x180] sm:$0xff]
        %v383 = vld [vmem:[#allocation5 + $0x188] sm:$0xff]
        %v384 = vld [vmem:[#allocation5 + $0x190] sm:$0xff]
        %v385 = vld [vmem:[#allocation5 + $0x198] sm:$0xff]
        %v386 = vld [vmem:[#allocation5 + $0x1a0] sm:$0xff]
        %v387 = vld [vmem:[#allocation5 + $0x1a8] sm:$0xff]
        %v388 = vld [vmem:[#allocation5 + $0x1b0] sm:$0xff]
        %v389 = vld [vmem:[#allocation5 + $0x1b8] sm:$0xff]
        %v390 = vld [vmem:[#allocation5 + $0x1c0] sm:$0xff]
        %v391 = vld [vmem:[#allocation5 + $0x1c8] sm:$0xff]
        %v392 = vld [vmem:[#allocation5 + $0x1d0] sm:$0xff]
        %v393 = vld [vmem:[#allocation5 + $0x1d8] sm:$0xff]
        %v394 = vld [vmem:[#allocation5 + $0x1e0] sm:$0xff]
        %v395 = vld [vmem:[#allocation5 + $0x1e8] sm:$0xff]
        %v396 = vld [vmem:[#allocation5 + $0x1f0] sm:$0xff]
        %v397 = vld [vmem:[#allocation5 + $0x1f8] sm:$0xff]
        %v398 = vld [vmem:[#allocation7] sm:$0xff]
        %v399 = vld [vmem:[#allocation7 + $0x8] sm:$0xff]
        %v400 = vld [vmem:[#allocation7 + $0x10] sm:$0xff]
        %v401 = vld [vmem:[#allocation7 + $0x18] sm:$0xff]
        %v402 = vld [vmem:[#allocation7 + $0x20] sm:$0xff]
        %v403 = vld [vmem:[#allocation7 + $0x28] sm:$0xff]
        %v404 = vld [vmem:[#allocation7 + $0x30] sm:$0xff]
        %v405 = vld [vmem:[#allocation7 + $0x38] sm:$0xff]
        %v406 = vld [vmem:[#allocation7 + $0x40] sm:$0xff]
        %v407 = vld [vmem:[#allocation7 + $0x48] sm:$0xff]
        %v408 = vld [vmem:[#allocation7 + $0x50] sm:$0xff]
        %v409 = vld [vmem:[#allocation7 + $0x58] sm:$0xff]
        %v410 = vld [vmem:[#allocation7 + $0x60] sm:$0xff]
        %v411 = vld [vmem:[#allocation7 + $0x68] sm:$0xff]
        %v412 = vld [vmem:[#allocation7 + $0x70] sm:$0xff]
        %v413 = vld [vmem:[#allocation7 + $0x78] sm:$0xff]
        %v414 = vld [vmem:[#allocation7 + $0x80] sm:$0xff]
        %v415 = vld [vmem:[#allocation7 + $0x88] sm:$0xff]
        %v416 = vld [vmem:[#allocation7 + $0x90] sm:$0xff]
        %v417 = vld [vmem:[#allocation7 + $0x98] sm:$0xff]
        %v418 = vld [vmem:[#allocation7 + $0xa0] sm:$0xff]
        %v419 = vld [vmem:[#allocation7 + $0xa8] sm:$0xff]
        %v420 = vld [vmem:[#allocation7 + $0xb0] sm:$0xff]
        %v421 = vld [vmem:[#allocation7 + $0xb8] sm:$0xff]
        %v422 = vld [vmem:[#allocation7 + $0xc0] sm:$0xff]
        %v423 = vld [vmem:[#allocation7 + $0xc8] sm:$0xff]
        %v424 = vld [vmem:[#allocation7 + $0xd0] sm:$0xff]
        %v425 = vld [vmem:[#allocation7 + $0xd8] sm:$0xff]
        %v426 = vld [vmem:[#allocation7 + $0xe0] sm:$0xff]
        %v427 = vld [vmem:[#allocation7 + $0xe8] sm:$0xff]
        %v428 = vld [vmem:[#allocation7 + $0xf0] sm:$0xff]
        %v429 = vld [vmem:[#allocation7 + $0xf8] sm:$0xff]
        %vm430 = vcmask 261120
        %v432 = vsel %vm430, %v333, 0
        %434 = vmatprep.subr.mxu0 %v399
        %435 = vmatpush1.msra.mxu0 %v398
        %436 = vmatprep.subr.mxu0 %v407
        %437 = vmatpush1.msra.mxu0 %v406
        %438 = vmatprep.subr.mxu0 %v415
        %439 = vmatpush1.msra.mxu0 %v414
        %440 = vmatprep.subr.mxu0 %v423
        %441 = vmatpush1.msra.mxu0 %v422
        %442 = vmatprep.subr.mxu0 0.0
        %443 = vmatpush1.msra.mxu0 0.0
        %444 = vmatprep.subr.mxu0 0.0
        %445 = vmatpush1.msra.mxu0 0.0
        %446 = vmatprep.subr.mxu0 0.0
        %447 = vmatpush1.msra.mxu0 0.0
        %448 = vmatprep.subr.mxu0 0.0
        %449 = vmatpush1.msra.mxu0 0.0
        %450 = vmatprep.subr.mxu0 0.0
        %451 = vmatpush1.msra.mxu0 0.0
        %452 = vmatprep.subr.mxu0 0.0
        %453 = vmatpush1.msra.mxu0 0.0
        %454 = vmatprep.subr.mxu0 0.0
        %455 = vmatpush1.msra.mxu0 0.0
        %456 = vmatprep.subr.mxu0 0.0
        %457 = vmatpush1.msra.mxu0 0.0
        %458 = vmatprep.subr.mxu0 0.0
        %459 = vmatpush1.msra.mxu0 0.0
        %460 = vmatprep.subr.mxu0 0.0
        %461 = vmatpush1.msra.mxu0 0.0
        %462 = vmatprep.subr.mxu0 0.0
        %463 = vmatpush1.msra.mxu0 0.0
        %464 = vmatprep.subr.mxu0 0.0
        %465 = vmatpush1.msra.mxu0 0.0
        %466 = vmatprep.subr.mxu0 0.0
        %467 = vmatpush1.msra.mxu0 0.0
        %468 = vmatprep.subr.mxu0 0.0
        %469 = vmatpush1.msra.mxu0 0.0
        %470 = vmatprep.subr.mxu0 0.0
        %471 = vmatpush1.msra.mxu0 0.0
        %472 = vmatprep.subr.mxu0 0.0
        %473 = vmatpush1.msra.mxu0 0.0
        %474 = vmatprep.subr.mxu0 0.0
        %475 = vmatpush1.msra.mxu0 0.0
        %476 = vmatprep.subr.mxu0 0.0
        %477 = vmatpush1.msra.mxu0 0.0
        %478 = vmatprep.subr.mxu0 0.0
        %479 = vmatpush1.msra.mxu0 0.0
        %480 = vmatprep.subr.mxu0 0.0
        %481 = vmatpush1.msra.mxu0 0.0
        %482 = vmatprep.subr.mxu0 0.0
        %483 = vmatpush1.msra.mxu0 0.0
        %484 = vmatprep.subr.mxu0 0.0
        %485 = vmatpush1.msra.mxu0 0.0
        %486 = vmatprep.subr.mxu0 0.0
        %487 = vmatpush1.msra.mxu0 0.0
        %488 = vmatprep.subr.mxu0 0.0
        %489 = vmatpush1.msra.mxu0 0.0
        %490 = vmatprep.subr.mxu0 0.0
        %491 = vmatpush1.msra.mxu0 0.0
        %492 = vmatprep.subr.mxu0 0.0
        %493 = vmatpush1.msra.mxu0 0.0
        %494 = vmatprep.subr.mxu0 0.0
        %495 = vmatpush1.msra.mxu0 0.0
        %496 = vmatprep.subr.mxu0 0.0
        %497 = vmatpush1.msra.mxu0 0.0
        %498 = vmatprep.mubr.f32.mxu0 0.0
        %499 = vmatmul.mubr.f32.gmra.mrb[0].mxu0 %v432
        %v500 = vpop.f32.mrb[0].mxu0
        %v501 = vadd.f32 0.0, %v500
        %v502 = vpop.f32.mrb[0].mxu0
        %v503 = vadd.f32 0.0, %v502
        %504 = vdwg.mxu0
        %505 = vmatprep.subr.mxu0 %v401
        %506 = vmatpush1.msra.mxu0 %v400
        %507 = vmatprep.subr.mxu0 %v409
        %508 = vmatpush1.msra.mxu0 %v408
        %509 = vmatprep.subr.mxu0 %v417
        %510 = vmatpush1.msra.mxu0 %v416
        %511 = vmatprep.subr.mxu0 %v425
        %512 = vmatpush1.msra.mxu0 %v424
        %513 = vmatprep.subr.mxu0 0.0
        %514 = vmatpush1.msra.mxu0 0.0
        %515 = vmatprep.subr.mxu0 0.0
        %516 = vmatpush1.msra.mxu0 0.0
        %517 = vmatprep.subr.mxu0 0.0
        %518 = vmatpush1.msra.mxu0 0.0
        %519 = vmatprep.subr.mxu0 0.0
        %520 = vmatpush1.msra.mxu0 0.0
        %521 = vmatprep.subr.mxu0 0.0
        %522 = vmatpush1.msra.mxu0 0.0
        %523 = vmatprep.subr.mxu0 0.0
        %524 = vmatpush1.msra.mxu0 0.0
        %525 = vmatprep.subr.mxu0 0.0
        %526 = vmatpush1.msra.mxu0 0.0
        %527 = vmatprep.subr.mxu0 0.0
        %528 = vmatpush1.msra.mxu0 0.0
        %529 = vmatprep.subr.mxu0 0.0
        %530 = vmatpush1.msra.mxu0 0.0
        %531 = vmatprep.subr.mxu0 0.0
        %532 = vmatpush1.msra.mxu0 0.0
        %533 = vmatprep.subr.mxu0 0.0
        %534 = vmatpush1.msra.mxu0 0.0
        %535 = vmatprep.subr.mxu0 0.0
        %536 = vmatpush1.msra.mxu0 0.0
        %537 = vmatprep.subr.mxu0 0.0
        %538 = vmatpush1.msra.mxu0 0.0
        %539 = vmatprep.subr.mxu0 0.0
        %540 = vmatpush1.msra.mxu0 0.0
        %541 = vmatprep.subr.mxu0 0.0
        %542 = vmatpush1.msra.mxu0 0.0
        %543 = vmatprep.subr.mxu0 0.0
        %544 = vmatpush1.msra.mxu0 0.0
        %545 = vmatprep.subr.mxu0 0.0
        %546 = vmatpush1.msra.mxu0 0.0
        %547 = vmatprep.subr.mxu0 0.0
        %548 = vmatpush1.msra.mxu0 0.0
        %549 = vmatprep.subr.mxu0 0.0
        %550 = vmatpush1.msra.mxu0 0.0
        %551 = vmatprep.subr.mxu0 0.0
        %552 = vmatpush1.msra.mxu0 0.0
        %553 = vmatprep.subr.mxu0 0.0
        %554 = vmatpush1.msra.mxu0 0.0
        %555 = vmatprep.subr.mxu0 0.0
        %556 = vmatpush1.msra.mxu0 0.0
        %557 = vmatprep.subr.mxu0 0.0
        %558 = vmatpush1.msra.mxu0 0.0
        %559 = vmatprep.subr.mxu0 0.0
        %560 = vmatpush1.msra.mxu0 0.0
        %561 = vmatprep.subr.mxu0 0.0
        %562 = vmatpush1.msra.mxu0 0.0
        %563 = vmatprep.subr.mxu0 0.0
        %564 = vmatpush1.msra.mxu0 0.0
        %565 = vmatprep.subr.mxu0 0.0
        %566 = vmatpush1.msra.mxu0 0.0
        %567 = vmatprep.subr.mxu0 0.0
        %568 = vmatpush1.msra.mxu0 0.0
        %569 = vmatprep.mubr.f32.mxu0 0.0
        %570 = vmatmul.mubr.f32.gmra.mrb[0].mxu0 %v432
        %v571 = vpop.f32.mrb[0].mxu0
        %v572 = vadd.f32 0.0, %v571
        %v573 = vpop.f32.mrb[0].mxu0
        %v574 = vadd.f32 0.0, %v573
        %575 = vdwg.mxu0
        %576 = vmatprep.subr.mxu0 %v403
        %577 = vmatpush1.msra.mxu0 %v402
        %578 = vmatprep.subr.mxu0 %v411
        %579 = vmatpush1.msra.mxu0 %v410
        %580 = vmatprep.subr.mxu0 %v419
        %581 = vmatpush1.msra.mxu0 %v418
        %582 = vmatprep.subr.mxu0 %v427
        %583 = vmatpush1.msra.mxu0 %v426
        %584 = vmatprep.subr.mxu0 0.0
        %585 = vmatpush1.msra.mxu0 0.0
        %586 = vmatprep.subr.mxu0 0.0
        %587 = vmatpush1.msra.mxu0 0.0
        %588 = vmatprep.subr.mxu0 0.0
        %589 = vmatpush1.msra.mxu0 0.0
        %590 = vmatprep.subr.mxu0 0.0
        %591 = vmatpush1.msra.mxu0 0.0
        %592 = vmatprep.subr.mxu0 0.0
        %593 = vmatpush1.msra.mxu0 0.0
        %594 = vmatprep.subr.mxu0 0.0
        %595 = vmatpush1.msra.mxu0 0.0
        %596 = vmatprep.subr.mxu0 0.0
        %597 = vmatpush1.msra.mxu0 0.0
        %598 = vmatprep.subr.mxu0 0.0
        %599 = vmatpush1.msra.mxu0 0.0
        %600 = vmatprep.subr.mxu0 0.0
        %601 = vmatpush1.msra.mxu0 0.0
        %602 = vmatprep.subr.mxu0 0.0
        %603 = vmatpush1.msra.mxu0 0.0
        %604 = vmatprep.subr.mxu0 0.0
        %605 = vmatpush1.msra.mxu0 0.0
        %606 = vmatprep.subr.mxu0 0.0
        %607 = vmatpush1.msra.mxu0 0.0
        %608 = vmatprep.subr.mxu0 0.0
        %609 = vmatpush1.msra.mxu0 0.0
        %610 = vmatprep.subr.mxu0 0.0
        %611 = vmatpush1.msra.mxu0 0.0
        %612 = vmatprep.subr.mxu0 0.0
        %613 = vmatpush1.msra.mxu0 0.0
        %614 = vmatprep.subr.mxu0 0.0
        %615 = vmatpush1.msra.mxu0 0.0
        %616 = vmatprep.subr.mxu0 0.0
        %617 = vmatpush1.msra.mxu0 0.0
        %618 = vmatprep.subr.mxu0 0.0
        %619 = vmatpush1.msra.mxu0 0.0
        %620 = vmatprep.subr.mxu0 0.0
        %621 = vmatpush1.msra.mxu0 0.0
        %622 = vmatprep.subr.mxu0 0.0
        %623 = vmatpush1.msra.mxu0 0.0
        %624 = vmatprep.subr.mxu0 0.0
        %625 = vmatpush1.msra.mxu0 0.0
        %626 = vmatprep.subr.mxu0 0.0
        %627 = vmatpush1.msra.mxu0 0.0
        %628 = vmatprep.subr.mxu0 0.0
        %629 = vmatpush1.msra.mxu0 0.0
        %630 = vmatprep.subr.mxu0 0.0
        %631 = vmatpush1.msra.mxu0 0.0
        %632 = vmatprep.subr.mxu0 0.0
        %633 = vmatpush1.msra.mxu0 0.0
        %634 = vmatprep.subr.mxu0 0.0
        %635 = vmatpush1.msra.mxu0 0.0
        %636 = vmatprep.subr.mxu0 0.0
        %637 = vmatpush1.msra.mxu0 0.0
        %638 = vmatprep.subr.mxu0 0.0
        %639 = vmatpush1.msra.mxu0 0.0
        %640 = vmatprep.mubr.f32.mxu0 0.0
        %641 = vmatmul.mubr.f32.gmra.mrb[0].mxu0 %v432
        %v642 = vpop.f32.mrb[0].mxu0
        %v643 = vadd.f32 0.0, %v642
        %v644 = vpop.f32.mrb[0].mxu0
        %v645 = vadd.f32 0.0, %v644
        %646 = vdwg.mxu0
        %647 = vmatprep.subr.mxu0 %v405
        %648 = vmatpush1.msra.mxu0 %v404
        %649 = vmatprep.subr.mxu0 %v413
        %650 = vmatpush1.msra.mxu0 %v412
        %651 = vmatprep.subr.mxu0 %v421
        %652 = vmatpush1.msra.mxu0 %v420
        %653 = vmatprep.subr.mxu0 %v429
        %654 = vmatpush1.msra.mxu0 %v428
        %655 = vmatprep.subr.mxu0 0.0
        %656 = vmatpush1.msra.mxu0 0.0
        %657 = vmatprep.subr.mxu0 0.0
        %658 = vmatpush1.msra.mxu0 0.0
        %659 = vmatprep.subr.mxu0 0.0
        %660 = vmatpush1.msra.mxu0 0.0
        %661 = vmatprep.subr.mxu0 0.0
        %662 = vmatpush1.msra.mxu0 0.0
        %663 = vmatprep.subr.mxu0 0.0
        %664 = vmatpush1.msra.mxu0 0.0
        %665 = vmatprep.subr.mxu0 0.0
        %666 = vmatpush1.msra.mxu0 0.0
        %667 = vmatprep.subr.mxu0 0.0
        %668 = vmatpush1.msra.mxu0 0.0
        %669 = vmatprep.subr.mxu0 0.0
        %670 = vmatpush1.msra.mxu0 0.0
        %671 = vmatprep.subr.mxu0 0.0
        %672 = vmatpush1.msra.mxu0 0.0
        %673 = vmatprep.subr.mxu0 0.0
        %674 = vmatpush1.msra.mxu0 0.0
        %675 = vmatprep.subr.mxu0 0.0
        %676 = vmatpush1.msra.mxu0 0.0
        %677 = vmatprep.subr.mxu0 0.0
        %678 = vmatpush1.msra.mxu0 0.0
        %679 = vmatprep.subr.mxu0 0.0
        %680 = vmatpush1.msra.mxu0 0.0
        %681 = vmatprep.subr.mxu0 0.0
        %682 = vmatpush1.msra.mxu0 0.0
        %683 = vmatprep.subr.mxu0 0.0
        %684 = vmatpush1.msra.mxu0 0.0
        %685 = vmatprep.subr.mxu0 0.0
        %686 = vmatpush1.msra.mxu0 0.0
        %687 = vmatprep.subr.mxu0 0.0
        %688 = vmatpush1.msra.mxu0 0.0
        %689 = vmatprep.subr.mxu0 0.0
        %690 = vmatpush1.msra.mxu0 0.0
        %691 = vmatprep.subr.mxu0 0.0
        %692 = vmatpush1.msra.mxu0 0.0
        %693 = vmatprep.subr.mxu0 0.0
        %694 = vmatpush1.msra.mxu0 0.0
        %695 = vmatprep.subr.mxu0 0.0
        %696 = vmatpush1.msra.mxu0 0.0
        %697 = vmatprep.subr.mxu0 0.0
        %698 = vmatpush1.msra.mxu0 0.0
        %699 = vmatprep.subr.mxu0 0.0
        %700 = vmatpush1.msra.mxu0 0.0
        %701 = vmatprep.subr.mxu0 0.0
        %702 = vmatpush1.msra.mxu0 0.0
        %703 = vmatprep.subr.mxu0 0.0
        %704 = vmatpush1.msra.mxu0 0.0
        %705 = vmatprep.subr.mxu0 0.0
        %706 = vmatpush1.msra.mxu0 0.0
        %707 = vmatprep.subr.mxu0 0.0
        %708 = vmatpush1.msra.mxu0 0.0
        %709 = vmatprep.subr.mxu0 0.0
        %710 = vmatpush1.msra.mxu0 0.0
        %711 = vmatprep.mubr.f32.mxu0 0.0
        %712 = vmatmul.mubr.f32.gmra.mrb[0].mxu0 %v432
        %v713 = vpop.f32.mrb[0].mxu0
        %v714 = vadd.f32 0.0, %v713
        %v715 = vpop.f32.mrb[0].mxu0
        %v716 = vadd.f32 0.0, %v715
        %717 = vdwg.mxu0
        %v718 = vlaneseq
        %v719 = vshrl.u32 %v718, 7
        %v720 = vsub.s32 0, %v719
        %v721 = vrot.slane %v501, %v720
        %v722 = vlaneseq
        %v723 = vshrl.u32 %v722, 7
        %v724 = vsub.s32 0, %v723
        %v725 = vrot.slane %v503, %v724
        %v726 = vlaneseq
        %v727 = vshrl.u32 %v726, 7
        %v728 = vsub.s32 0, %v727
        %v729 = vrot.slane %v572, %v728
        %v730 = vlaneseq
        %v731 = vshrl.u32 %v730, 7
        %v732 = vsub.s32 0, %v731
        %v733 = vrot.slane %v574, %v732
        %v734 = vlaneseq
        %v735 = vshrl.u32 %v734, 7
        %v736 = vsub.s32 0, %v735
        %v737 = vrot.slane %v643, %v736
        %v738 = vlaneseq
        %v739 = vshrl.u32 %v738, 7
        %v740 = vsub.s32 0, %v739
        %v741 = vrot.slane %v645, %v740
        %v742 = vlaneseq
        %v743 = vshrl.u32 %v742, 7
        %v744 = vsub.s32 0, %v743
        %v745 = vrot.slane %v714, %v744
        %v746 = vlaneseq
        %v747 = vshrl.u32 %v746, 7
        %v748 = vsub.s32 0, %v747
        %v749 = vrot.slane %v716, %v748
        %vm750 = vcmask 523264
        %v752 = vsel %vm750, %v330, 0
        %v755 = vsel %vm750, %v331, 0
        %757 = vmatprep.subr.mxu0 %v335
        %758 = vmatpush1.msra.mxu0 %v334
        %759 = vmatprep.subr.mxu0 %v343
        %760 = vmatpush1.msra.mxu0 %v342
        %761 = vmatprep.subr.mxu0 %v351
        %762 = vmatpush1.msra.mxu0 %v350
        %763 = vmatprep.subr.mxu0 %v359
        %764 = vmatpush1.msra.mxu0 %v358
        %765 = vmatprep.subr.mxu0 %v367
        %766 = vmatpush1.msra.mxu0 %v366
        %767 = vmatprep.subr.mxu0 %v375
        %768 = vmatpush1.msra.mxu0 %v374
        %769 = vmatprep.subr.mxu0 %v383
        %770 = vmatpush1.msra.mxu0 %v382
        %771 = vmatprep.subr.mxu0 %v391
        %772 = vmatpush1.msra.mxu0 %v390
        %773 = vmatprep.subr.mxu0 0.0
        %774 = vmatpush1.msra.mxu0 0.0
        %775 = vmatprep.subr.mxu0 0.0
        %776 = vmatpush1.msra.mxu0 0.0
        %777 = vmatprep.subr.mxu0 0.0
        %778 = vmatpush1.msra.mxu0 0.0
        %779 = vmatprep.subr.mxu0 0.0
        %780 = vmatpush1.msra.mxu0 0.0
        %781 = vmatprep.subr.mxu0 0.0
        %782 = vmatpush1.msra.mxu0 0.0
        %783 = vmatprep.subr.mxu0 0.0
        %784 = vmatpush1.msra.mxu0 0.0
        %785 = vmatprep.subr.mxu0 0.0
        %786 = vmatpush1.msra.mxu0 0.0
        %787 = vmatprep.subr.mxu0 0.0
        %788 = vmatpush1.msra.mxu0 0.0
        %789 = vmatprep.subr.mxu0 0.0
        %790 = vmatpush1.msra.mxu0 0.0
        %791 = vmatprep.subr.mxu0 0.0
        %792 = vmatpush1.msra.mxu0 0.0
        %793 = vmatprep.subr.mxu0 0.0
        %794 = vmatpush1.msra.mxu0 0.0
        %795 = vmatprep.subr.mxu0 0.0
        %796 = vmatpush1.msra.mxu0 0.0
        %797 = vmatprep.subr.mxu0 0.0
        %798 = vmatpush1.msra.mxu0 0.0
        %799 = vmatprep.subr.mxu0 0.0
        %800 = vmatpush1.msra.mxu0 0.0
        %801 = vmatprep.subr.mxu0 0.0
        %802 = vmatpush1.msra.mxu0 0.0
        %803 = vmatprep.subr.mxu0 0.0
        %804 = vmatpush1.msra.mxu0 0.0
        %805 = vmatprep.subr.mxu0 0.0
        %806 = vmatpush1.msra.mxu0 0.0
        %807 = vmatprep.subr.mxu0 0.0
        %808 = vmatpush1.msra.mxu0 0.0
        %809 = vmatprep.subr.mxu0 0.0
        %810 = vmatpush1.msra.mxu0 0.0
        %811 = vmatprep.subr.mxu0 0.0
        %812 = vmatpush1.msra.mxu0 0.0
        %813 = vmatprep.subr.mxu0 0.0
        %814 = vmatpush1.msra.mxu0 0.0
        %815 = vmatprep.subr.mxu0 0.0
        %816 = vmatpush1.msra.mxu0 0.0
        %817 = vmatprep.subr.mxu0 0.0
        %818 = vmatpush1.msra.mxu0 0.0
        %819 = vmatprep.subr.mxu0 0.0
        %820 = vmatpush1.msra.mxu0 0.0
        %821 = vmatprep.mubr.f32.mxu0 0.0
        %822 = vmatmul.mubr.f32.gmra.mrb[0].mxu0 %v752
        %v823 = vpop.f32.mrb[0].mxu0
        %v824 = vadd.f32 %v721, %v823
        %v825 = vpop.f32.mrb[0].mxu0
        %v826 = vadd.f32 %v725, %v825
        %827 = vmatprep.mubr.f32.mxu0 0.0
        %828 = vmatmul.mubr.f32.gmra.mrb[0].mxu0 %v755
        %v829 = vpop.f32.mrb[0].mxu0
        %v830 = vadd.f32 %v721, %v829
        %v831 = vpop.f32.mrb[0].mxu0
        %v832 = vadd.f32 %v725, %v831
        %833 = vdwg.mxu0
        %834 = vmatprep.subr.mxu0 %v337
        %835 = vmatpush1.msra.mxu0 %v336
        %836 = vmatprep.subr.mxu0 %v345
        %837 = vmatpush1.msra.mxu0 %v344
        %838 = vmatprep.subr.mxu0 %v353
        %839 = vmatpush1.msra.mxu0 %v352
        %840 = vmatprep.subr.mxu0 %v361
        %841 = vmatpush1.msra.mxu0 %v360
        %842 = vmatprep.subr.mxu0 %v369
        %843 = vmatpush1.msra.mxu0 %v368
        %844 = vmatprep.subr.mxu0 %v377
        %845 = vmatpush1.msra.mxu0 %v376
        %846 = vmatprep.subr.mxu0 %v385
        %847 = vmatpush1.msra.mxu0 %v384
        %848 = vmatprep.subr.mxu0 %v393
        %849 = vmatpush1.msra.mxu0 %v392
        %850 = vmatprep.subr.mxu0 0.0
        %851 = vmatpush1.msra.mxu0 0.0
        %852 = vmatprep.subr.mxu0 0.0
        %853 = vmatpush1.msra.mxu0 0.0
        %854 = vmatprep.subr.mxu0 0.0
        %855 = vmatpush1.msra.mxu0 0.0
        %856 = vmatprep.subr.mxu0 0.0
        %857 = vmatpush1.msra.mxu0 0.0
        %858 = vmatprep.subr.mxu0 0.0
        %859 = vmatpush1.msra.mxu0 0.0
        %860 = vmatprep.subr.mxu0 0.0
        %861 = vmatpush1.msra.mxu0 0.0
        %862 = vmatprep.subr.mxu0 0.0
        %863 = vmatpush1.msra.mxu0 0.0
        %864 = vmatprep.subr.mxu0 0.0
        %865 = vmatpush1.msra.mxu0 0.0
        %866 = vmatprep.subr.mxu0 0.0
        %867 = vmatpush1.msra.mxu0 0.0
        %868 = vmatprep.subr.mxu0 0.0
        %869 = vmatpush1.msra.mxu0 0.0
        %870 = vmatprep.subr.mxu0 0.0
        %871 = vmatpush1.msra.mxu0 0.0
        %872 = vmatprep.subr.mxu0 0.0
        %873 = vmatpush1.msra.mxu0 0.0
        %874 = vmatprep.subr.mxu0 0.0
        %875 = vmatpush1.msra.mxu0 0.0
        %876 = vmatprep.subr.mxu0 0.0
        %877 = vmatpush1.msra.mxu0 0.0
        %878 = vmatprep.subr.mxu0 0.0
        %879 = vmatpush1.msra.mxu0 0.0
        %880 = vmatprep.subr.mxu0 0.0
        %881 = vmatpush1.msra.mxu0 0.0
        %882 = vmatprep.subr.mxu0 0.0
        %883 = vmatpush1.msra.mxu0 0.0
        %884 = vmatprep.subr.mxu0 0.0
        %885 = vmatpush1.msra.mxu0 0.0
        %886 = vmatprep.subr.mxu0 0.0
        %887 = vmatpush1.msra.mxu0 0.0
        %888 = vmatprep.subr.mxu0 0.0
        %889 = vmatpush1.msra.mxu0 0.0
        %890 = vmatprep.subr.mxu0 0.0
        %891 = vmatpush1.msra.mxu0 0.0
        %892 = vmatprep.subr.mxu0 0.0
        %893 = vmatpush1.msra.mxu0 0.0
        %894 = vmatprep.subr.mxu0 0.0
        %895 = vmatpush1.msra.mxu0 0.0
        %896 = vmatprep.subr.mxu0 0.0
        %897 = vmatpush1.msra.mxu0 0.0
        %898 = vmatprep.mubr.f32.mxu0 0.0
        %899 = vmatmul.mubr.f32.gmra.mrb[0].mxu0 %v752
        %v900 = vpop.f32.mrb[0].mxu0
        %v901 = vadd.f32 %v729, %v900
        %v902 = vpop.f32.mrb[0].mxu0
        %v903 = vadd.f32 %v733, %v902
        %904 = vmatprep.mubr.f32.mxu0 0.0
        %905 = vmatmul.mubr.f32.gmra.mrb[0].mxu0 %v755
        %v906 = vpop.f32.mrb[0].mxu0
        %v907 = vadd.f32 %v729, %v906
        %v908 = vpop.f32.mrb[0].mxu0
        %v909 = vadd.f32 %v733, %v908
        %910 = vdwg.mxu0
        %911 = vmatprep.subr.mxu0 %v339
        %912 = vmatpush1.msra.mxu0 %v338
        %913 = vmatprep.subr.mxu0 %v347
        %914 = vmatpush1.msra.mxu0 %v346
        %915 = vmatprep.subr.mxu0 %v355
        %916 = vmatpush1.msra.mxu0 %v354
        %917 = vmatprep.subr.mxu0 %v363
        %918 = vmatpush1.msra.mxu0 %v362
        %919 = vmatprep.subr.mxu0 %v371
        %920 = vmatpush1.msra.mxu0 %v370
        %921 = vmatprep.subr.mxu0 %v379
        %922 = vmatpush1.msra.mxu0 %v378
        %923 = vmatprep.subr.mxu0 %v387
        %924 = vmatpush1.msra.mxu0 %v386
        %925 = vmatprep.subr.mxu0 %v395
        %926 = vmatpush1.msra.mxu0 %v394
        %927 = vmatprep.subr.mxu0 0.0
        %928 = vmatpush1.msra.mxu0 0.0
        %929 = vmatprep.subr.mxu0 0.0
        %930 = vmatpush1.msra.mxu0 0.0
        %931 = vmatprep.subr.mxu0 0.0
        %932 = vmatpush1.msra.mxu0 0.0
        %933 = vmatprep.subr.mxu0 0.0
        %934 = vmatpush1.msra.mxu0 0.0
        %935 = vmatprep.subr.mxu0 0.0
        %936 = vmatpush1.msra.mxu0 0.0
        %937 = vmatprep.subr.mxu0 0.0
        %938 = vmatpush1.msra.mxu0 0.0
        %939 = vmatprep.subr.mxu0 0.0
        %940 = vmatpush1.msra.mxu0 0.0
        %941 = vmatprep.subr.mxu0 0.0
        %942 = vmatpush1.msra.mxu0 0.0
        %943 = vmatprep.subr.mxu0 0.0
        %944 = vmatpush1.msra.mxu0 0.0
        %945 = vmatprep.subr.mxu0 0.0
        %946 = vmatpush1.msra.mxu0 0.0
        %947 = vmatprep.subr.mxu0 0.0
        %948 = vmatpush1.msra.mxu0 0.0
        %949 = vmatprep.subr.mxu0 0.0
        %950 = vmatpush1.msra.mxu0 0.0
        %951 = vmatprep.subr.mxu0 0.0
        %952 = vmatpush1.msra.mxu0 0.0
        %953 = vmatprep.subr.mxu0 0.0
        %954 = vmatpush1.msra.mxu0 0.0
        %955 = vmatprep.subr.mxu0 0.0
        %956 = vmatpush1.msra.mxu0 0.0
        %957 = vmatprep.subr.mxu0 0.0
        %958 = vmatpush1.msra.mxu0 0.0
        %959 = vmatprep.subr.mxu0 0.0
        %960 = vmatpush1.msra.mxu0 0.0
        %961 = vmatprep.subr.mxu0 0.0
        %962 = vmatpush1.msra.mxu0 0.0
        %963 = vmatprep.subr.mxu0 0.0
        %964 = vmatpush1.msra.mxu0 0.0
        %965 = vmatprep.subr.mxu0 0.0
        %966 = vmatpush1.msra.mxu0 0.0
        %967 = vmatprep.subr.mxu0 0.0
        %968 = vmatpush1.msra.mxu0 0.0
        %969 = vmatprep.subr.mxu0 0.0
        %970 = vmatpush1.msra.mxu0 0.0
        %971 = vmatprep.subr.mxu0 0.0
        %972 = vmatpush1.msra.mxu0 0.0
        %973 = vmatprep.subr.mxu0 0.0
        %974 = vmatpush1.msra.mxu0 0.0
        %975 = vmatprep.mubr.f32.mxu0 0.0
        %976 = vmatmul.mubr.f32.gmra.mrb[0].mxu0 %v752
        %v977 = vpop.f32.mrb[0].mxu0
        %v978 = vadd.f32 %v737, %v977
        %v979 = vpop.f32.mrb[0].mxu0
        %v980 = vadd.f32 %v741, %v979
        %981 = vmatprep.mubr.f32.mxu0 0.0
        %982 = vmatmul.mubr.f32.gmra.mrb[0].mxu0 %v755
        %v983 = vpop.f32.mrb[0].mxu0
        %v984 = vadd.f32 %v737, %v983
        %v985 = vpop.f32.mrb[0].mxu0
        %v986 = vadd.f32 %v741, %v985
        %987 = vdwg.mxu0
        %988 = vmatprep.subr.mxu0 %v341
        %989 = vmatpush1.msra.mxu0 %v340
        %990 = vmatprep.subr.mxu0 %v349
        %991 = vmatpush1.msra.mxu0 %v348
        %992 = vmatprep.subr.mxu0 %v357
        %993 = vmatpush1.msra.mxu0 %v356
        %994 = vmatprep.subr.mxu0 %v365
        %995 = vmatpush1.msra.mxu0 %v364
        %996 = vmatprep.subr.mxu0 %v373
        %997 = vmatpush1.msra.mxu0 %v372
        %998 = vmatprep.subr.mxu0 %v381
        %999 = vmatpush1.msra.mxu0 %v380
        %1000 = vmatprep.subr.mxu0 %v389
        %1001 = vmatpush1.msra.mxu0 %v388
        %1002 = vmatprep.subr.mxu0 %v397
        %1003 = vmatpush1.msra.mxu0 %v396
        %1004 = vmatprep.subr.mxu0 0.0
        %1005 = vmatpush1.msra.mxu0 0.0
        %1006 = vmatprep.subr.mxu0 0.0
        %1007 = vmatpush1.msra.mxu0 0.0
        %1008 = vmatprep.subr.mxu0 0.0
        %1009 = vmatpush1.msra.mxu0 0.0
        %1010 = vmatprep.subr.mxu0 0.0
        %1011 = vmatpush1.msra.mxu0 0.0
        %1012 = vmatprep.subr.mxu0 0.0
        %1013 = vmatpush1.msra.mxu0 0.0
        %1014 = vmatprep.subr.mxu0 0.0
        %1015 = vmatpush1.msra.mxu0 0.0
        %1016 = vmatprep.subr.mxu0 0.0
        %1017 = vmatpush1.msra.mxu0 0.0
        %1018 = vmatprep.subr.mxu0 0.0
        %1019 = vmatpush1.msra.mxu0 0.0
        %1020 = vmatprep.subr.mxu0 0.0
        %1021 = vmatpush1.msra.mxu0 0.0
        %1022 = vmatprep.subr.mxu0 0.0
        %1023 = vmatpush1.msra.mxu0 0.0
        %1024 = vmatprep.subr.mxu0 0.0
        %1025 = vmatpush1.msra.mxu0 0.0
        %1026 = vmatprep.subr.mxu0 0.0
        %1027 = vmatpush1.msra.mxu0 0.0
        %1028 = vmatprep.subr.mxu0 0.0
        %1029 = vmatpush1.msra.mxu0 0.0
        %1030 = vmatprep.subr.mxu0 0.0
        %1031 = vmatpush1.msra.mxu0 0.0
        %1032 = vmatprep.subr.mxu0 0.0
        %1033 = vmatpush1.msra.mxu0 0.0
        %1034 = vmatprep.subr.mxu0 0.0
        %1035 = vmatpush1.msra.mxu0 0.0
        %1036 = vmatprep.subr.mxu0 0.0
        %1037 = vmatpush1.msra.mxu0 0.0
        %1038 = vmatprep.subr.mxu0 0.0
        %1039 = vmatpush1.msra.mxu0 0.0
        %1040 = vmatprep.subr.mxu0 0.0
        %1041 = vmatpush1.msra.mxu0 0.0
        %1042 = vmatprep.subr.mxu0 0.0
        %1043 = vmatpush1.msra.mxu0 0.0
        %1044 = vmatprep.subr.mxu0 0.0
        %1045 = vmatpush1.msra.mxu0 0.0
        %1046 = vmatprep.subr.mxu0 0.0
        %1047 = vmatpush1.msra.mxu0 0.0
        %1048 = vmatprep.subr.mxu0 0.0
        %1049 = vmatpush1.msra.mxu0 0.0
        %1050 = vmatprep.subr.mxu0 0.0
        %1051 = vmatpush1.msra.mxu0 0.0
        %1052 = vmatprep.mubr.f32.mxu0 0.0
        %1053 = vmatmul.mubr.f32.gmra.mrb[0].mxu0 %v752
        %v1054 = vpop.f32.mrb[0].mxu0
        %v1055 = vadd.f32 %v745, %v1054
        %v1056 = vpop.f32.mrb[0].mxu0
        %v1057 = vadd.f32 %v749, %v1056
        %1058 = vmatprep.mubr.f32.mxu0 0.0
        %1059 = vmatmul.mubr.f32.gmra.mrb[0].mxu0 %v755
        %v1060 = vpop.f32.mrb[0].mxu0
        %v1061 = vadd.f32 %v745, %v1060
        %v1062 = vpop.f32.mrb[0].mxu0
        %v1063 = vadd.f32 %v749, %v1062
        %1064 = vdwg.mxu0
        %v1065 = vld [vmem:[%s4] sm:$0xff]
        %v1067 = vlaneseq
        %v1068 = vshrl.u32 %v1067, 7
        %v1069 = vsub.s32 0, %v1068
        %v1070 = vrot.slane %v1065, %v1069
        %v1071 = vlaneseq
        %v1072 = vshrl.u32 %v1071, 7
        %v1073 = vsub.s32 1, %v1072
        %v1074 = vrot.slane %v1065, %v1073
        %v1075 = vlaneseq
        %v1076 = vshrl.u32 %v1075, 7
        %v1077 = vsub.s32 2, %v1076
        %v1078 = vrot.slane %v1065, %v1077
        %v1079 = vlaneseq
        %v1080 = vshrl.u32 %v1079, 7
        %v1081 = vsub.s32 3, %v1080
        %v1082 = vrot.slane %v1065, %v1081
        %v1083 = vlaneseq
        %v1084 = vshrl.u32 %v1083, 7
        %v1085 = vsub.s32 4, %v1084
        %v1086 = vrot.slane %v1065, %v1085
        %v1087 = vlaneseq
        %v1088 = vshrl.u32 %v1087, 7
        %v1089 = vsub.s32 5, %v1088
        %v1090 = vrot.slane %v1065, %v1089
        %v1091 = vlaneseq
        %v1092 = vshrl.u32 %v1091, 7
        %v1093 = vsub.s32 6, %v1092
        %v1094 = vrot.slane %v1065, %v1093
        %v1095 = vlaneseq
        %v1096 = vshrl.u32 %v1095, 7
        %v1097 = vsub.s32 7, %v1096
        %v1098 = vrot.slane %v1065, %v1097
        %v1107 = vadd.f32 %v824, %v1070
        %v1108 = vadd.f32 %v826, %v1074
        %v1109 = vadd.f32 %v901, %v1078
        %v1110 = vadd.f32 %v903, %v1082
        %v1111 = vadd.f32 %v978, %v1086
        %v1112 = vadd.f32 %v980, %v1090
        %v1113 = vadd.f32 %v1055, %v1094
        %v1114 = vadd.f32 %v1057, %v1098
        %v1115 = vadd.f32 %v830, %v1070
        %v1116 = vadd.f32 %v832, %v1074
        %v1117 = vadd.f32 %v907, %v1078
        %v1118 = vadd.f32 %v909, %v1082
        %v1119 = vadd.f32 %v984, %v1086
        %v1120 = vadd.f32 %v986, %v1090
        %v1121 = vadd.f32 %v1061, %v1094
        %v1122 = vadd.f32 %v1063, %v1098
        %v1123 = vmax.f32 %v1107, 0.0
        %v1124 = vmax.f32 %v1108, 0.0
        %v1125 = vmax.f32 %v1109, 0.0
        %v1126 = vmax.f32 %v1110, 0.0
        %v1127 = vmax.f32 %v1111, 0.0
        %v1128 = vmax.f32 %v1112, 0.0
        %v1129 = vmax.f32 %v1113, 0.0
        %v1130 = vmax.f32 %v1114, 0.0
        %v1131 = vmax.f32 %v1115, 0.0
        %v1132 = vmax.f32 %v1116, 0.0
        %v1133 = vmax.f32 %v1117, 0.0
        %v1134 = vmax.f32 %v1118, 0.0
        %v1135 = vmax.f32 %v1119, 0.0
        %v1136 = vmax.f32 %v1120, 0.0
        %v1137 = vmax.f32 %v1121, 0.0
        %v1138 = vmax.f32 %v1122, 0.0
        %v1139 = vld [vmem:[%s5] sm:$0xff]
        %v1141 = vlaneseq
        %v1142 = vshrl.u32 %v1141, 7
        %v1143 = vsub.s32 0, %v1142
        %v1144 = vrot.slane %v1139, %v1143
        %v1145 = vlaneseq
        %v1146 = vshrl.u32 %v1145, 7
        %v1147 = vsub.s32 1, %v1146
        %v1148 = vrot.slane %v1139, %v1147
        %v1149 = vlaneseq
        %v1150 = vshrl.u32 %v1149, 7
        %v1151 = vsub.s32 2, %v1150
        %v1152 = vrot.slane %v1139, %v1151
        %v1153 = vlaneseq
        %v1154 = vshrl.u32 %v1153, 7
        %v1155 = vsub.s32 3, %v1154
        %v1156 = vrot.slane %v1139, %v1155
        %v1157 = vlaneseq
        %v1158 = vshrl.u32 %v1157, 7
        %v1159 = vsub.s32 4, %v1158
        %v1160 = vrot.slane %v1139, %v1159
        %v1161 = vlaneseq
        %v1162 = vshrl.u32 %v1161, 7
        %v1163 = vsub.s32 5, %v1162
        %v1164 = vrot.slane %v1139, %v1163
        %v1165 = vlaneseq
        %v1166 = vshrl.u32 %v1165, 7
        %v1167 = vsub.s32 6, %v1166
        %v1168 = vrot.slane %v1139, %v1167
        %v1169 = vlaneseq
        %v1170 = vshrl.u32 %v1169, 7
        %v1171 = vsub.s32 7, %v1170
        %v1172 = vrot.slane %v1139, %v1171
        %v1181 = vmul.f32 %v1123, %v1144
        %v1182 = vmul.f32 %v1124, %v1148
        %v1183 = vmul.f32 %v1125, %v1152
        %v1184 = vmul.f32 %v1126, %v1156
        %v1185 = vmul.f32 %v1127, %v1160
        %v1186 = vmul.f32 %v1128, %v1164
        %v1187 = vmul.f32 %v1129, %v1168
        %v1188 = vmul.f32 %v1130, %v1172
        %v1189 = vmul.f32 %v1131, %v1144
        %v1190 = vmul.f32 %v1132, %v1148
        %v1191 = vmul.f32 %v1133, %v1152
        %v1192 = vmul.f32 %v1134, %v1156
        %v1193 = vmul.f32 %v1135, %v1160
        %v1194 = vmul.f32 %v1136, %v1164
        %v1195 = vmul.f32 %v1137, %v1168
        %v1196 = vmul.f32 %v1138, %v1172
        %v1197 = vadd.f32 %v1181, %v1182
        %v1198 = vadd.f32 %v1197, %v1183
        %v1199 = vadd.f32 %v1198, %v1184
        %v1200 = vadd.f32 %v1199, %v1185
        %v1201 = vadd.f32 %v1200, %v1186
        %v1202 = vadd.f32 %v1201, %v1187
        %v1203 = vadd.f32 %v1202, %v1188
        %1204 = vadd.xlane.f32.xlu0 %v1203
        %v1205 = vpop.xlane.xlu0 %1204
        %v1206 = vadd.f32 %v1189, %v1190
        %v1207 = vadd.f32 %v1206, %v1191
        %v1208 = vadd.f32 %v1207, %v1192
        %v1209 = vadd.f32 %v1208, %v1193
        %v1210 = vadd.f32 %v1209, %v1194
        %v1211 = vadd.f32 %v1210, %v1195
        %v1212 = vadd.f32 %v1211, %v1196
        %1213 = vadd.xlane.f32.xlu0 %v1212
        %v1214 = vpop.xlane.xlu0 %1213
        %v1215 = vld [vmem:[#allocation2] sm:$0x1]
        %v1217 = vlaneseq
        %v1218 = vshrl.u32 %v1217, 7
        %v1219 = vsub.s32 0, %v1218
        %v1220 = vrot.slane %v1215, %v1219
        %v1222 = vadd.f32 %v1205, %v1220
        %v1223 = vadd.f32 %v1214, %v1220
        %vm1224 = vcmask 7168
        %v1225 = vsel %vm1224, %v1222, -inf
        %v1226 = vsel %vm1224, %v1223, -inf
        %v1227 = vmax.f32 %v1225, %v1226
        %v1228 = vrot.slane %v1227, 4
        %v1229 = vmax.f32 %v1227, %v1228
        %v1230 = vrot.slane %v1229, 2
        %v1231 = vmax.f32 %v1229, %v1230
        %v1232 = vrot.slane %v1231, 1
        %v1233 = vmax.f32 %v1231, %v1232
        %v1234 = vsub.f32 %v1222, %v1233
        %v1235 = vsub.f32 %v1223, %v1233
        %v1236 = vmul.f32 %v1234, 1.442695
        %v1237 = vpow.pop %v1236
        %v1238 = vmul.f32 %v1235, 1.442695
        %v1239 = vpow.pop %v1238
        %v1240 = vsel %vm1224, %v1237, 0.0
        %v1241 = vsel %vm1224, %v1239, 0.0
        %v1242 = vadd.f32 %v1240, %v1241
        %v1243 = vrot.slane %v1242, 4
        %v1244 = vadd.f32 %v1242, %v1243
        %v1245 = vrot.slane %v1244, 2
        %v1246 = vadd.f32 %v1244, %v1245
        %v1247 = vrot.slane %v1246, 1
        %v1248 = vadd.f32 %v1246, %v1247
        %v1249 = vrcp.pop %v1248
        %v1250 = vmul.f32 %v1237, %v1249
        %v1251 = vmul.f32 %v1239, %v1249
        %1252 = vst.msk [vmem:[%s329] sm:$0xff] %vm1224, %v1250
        %1253 = vst.msk [vmem:[%s329 + $0x8] sm:$0xff] %vm1224, %v1251
        %p1254 = scmp.lt.s32.totalorder %s24, 1
        %s1255 = scalar_select %p1254, %s24, 1
        %s1256 = smul.addr %s1255, 2
        %s1257 = smul.addr %s1256, 8
        %s1258 = scalar_lea.vmem %s7, %s1257
        // Predicated region
        $region61: #{tpu_custom_call.1} parent=47 // pred_check
          %p1259 = pneg %p194
        $region62: #{tpu_custom_call.1} parent=47 // pred_check_branch
          %1261 = sbr.rel (%p1259) target = $region64
        $region63: #{tpu_custom_call.1} parent=47 // pred_region
          _
        $region64: #{tpu_custom_call.1} parent=47 // pred_fallthru
          _
      $region48: #{tpu_custom_call.1} parent=5 // pred_fallthru
        _
      %p1262 = scmp.le.s32.totalorder 2, %s19
      // Predicated region
      $region65: #{tpu_custom_call.1} parent=5 // pred_check
        %p1263 = pneg %p1262
      $region66: #{tpu_custom_call.1} parent=5 // pred_check_branch
        %1265 = sbr.rel (%p1263) target = $region68
      $region67: #{tpu_custom_call.1} parent=5 // pred_region
        %s1266 = ssub.s32 %s19, 2
        // Predicated region
        $region69: #{tpu_custom_call.1} parent=67 // pred_check
          %p1267 = pneg %p200
        $region70: #{tpu_custom_call.1} parent=67 // pred_check_branch
          %1269 = sbr.rel (%p1267) target = $region72
        $region71: #{tpu_custom_call.1} parent=67 // pred_region
          %p1270 = scmp.lt.s32.totalorder %s25, 1
          %s1271 = scalar_select %p1270, %s25, 1
          %s1272 = smul.addr %s1271, 2
          %s1273 = smul.addr %s1272, 8
          %s1274 = scalar_lea.vmem %s7, %s1273
        $region72: #{tpu_custom_call.1} parent=67 // pred_fallthru
          _
      $region68: #{tpu_custom_call.1} parent=5 // pred_fallthru
        _
    $region6: #{tpu_custom_call.1} parent=1 // loop_footer
      %s23 = sadd.s32 1, %s19
    $region7: #{tpu_custom_call.1} parent=1 // loop_footer_branch
      %18 = sbr.rel target = $region3
    $region8: #{tpu_custom_call.1} parent=1 // loop_exit
      _
    %1275 = vsyncpa [#allocation4], 1
    %s1276 = scalar_lea.sflag [#allocation4], 1
    %1277 = vsyncpa %s1276, 1
    %1278 = vsyncpa [#allocation6], 1

</llo_original>
